<compile_context>
chip_gen: v7x
topology: tpu7x:2x2x1
jax: 0.10.0
libtpu: 0.0.40
codegen_flags: <defaults>
</compile_context>

<pallas_src>
import numpy as np
import jax
import jax.numpy as jnp
from jax.experimental import pallas as pl
from jax.experimental.pallas import tpu as pltpu

_LANE = 128
_SUB = 8


def _round_up(x, m):
    return (x + m - 1) // m * m


# ---------------------------------------------------------------------------
# Parameter initialization (PyTorch default U(-1/sqrt(fan_in), +1/sqrt(fan_in)))
# in PyTorch layouts: Linear weight (out, in); LSTM weight_ih_l0 (4F, F) with
# gate order [i, f, g, o]; biases b_ih, b_hh of shape (4F,).
# ---------------------------------------------------------------------------
def _uniform(key, shape, bound):
    return jax.random.uniform(key, shape, jnp.float32, -bound, bound)


def init_params(key, feature_dim, net_arch):
    shared_dims, pi_dims, vf_dims = [], [], []
    for layer in net_arch:
        if isinstance(layer, int):
            shared_dims.append(layer)
        elif isinstance(layer, dict):
            pi_dims = list(layer["pi"])
            vf_dims = list(layer["vf"])
            break

    n_lin = len(shared_dims) + len(pi_dims) + len(vf_dims)
    keys = iter(jax.random.split(key, 3 + 2 * max(n_lin, 1)))
    F = feature_dim
    kb = 1.0 / np.sqrt(F)
    params = {
        "w_ih": _uniform(next(keys), (4 * F, F), kb),
        "b_ih": _uniform(next(keys), (4 * F,), kb),
        "b_hh": _uniform(next(keys), (4 * F,), kb),
        # weight_hh_l0 exists in the module but multiplies h0 == 0 for a single
        # step from zero state, so it never enters the forward math.
    }

    def stack(dims, last):
        layers = []
        for d in dims:
            bnd = 1.0 / np.sqrt(last)
            layers.append((_uniform(next(keys), (d, last), bnd),
                           _uniform(next(keys), (d,), bnd)))
            last = d
        return layers, last

    params["shared"], last_shared = stack(shared_dims, F)
    # LSTMACNetwork wires the pi/vf heads to feature_dim inputs while forward()
    # feeds them `shared`; any runnable config has last_shared == feature_dim.
    if (pi_dims or vf_dims) and last_shared != F:
        raise ValueError("last shared layer width must equal feature_dim "
                         "(required by LSTMACNetwork's own wiring)")
    params["pi"], _ = stack(pi_dims, F)
    params["vf"], _ = stack(vf_dims, F)
    return params


# ---------------------------------------------------------------------------
# Host-side packing: one lane-dense weight slab (dtype configurable) + one f32
# bias slab + static offset metadata. Every block is padded to full (8, 128)
# tiles so all in-kernel slices are unmasked full-lane loads.
# ---------------------------------------------------------------------------
def pack_params(params, dtype=jnp.float32):
    F = int(np.asarray(params["w_ih"]).shape[1])
    Fp = _round_up(F, _LANE)                     # padded input / hidden width
    w_ih = np.asarray(params["w_ih"], np.float32)                 # (4F, F)
    b_sum = (np.asarray(params["b_ih"], np.float32)
             + np.asarray(params["b_hh"], np.float32))            # (4F,)

    w_blocks, b_blocks = [], []

    def add_w(buf):
        w_blocks.append(np.asarray(buf, np.float32))
        return len(w_blocks) - 1

    def add_b(buf):
        b_blocks.append(np.asarray(buf, np.float32))
        return len(b_blocks) - 1

    # ---- fused LSTM gate block: gates i/g/o at 128-aligned column offsets ----
    # PyTorch gate order is [i, f, g, o]; the forget gate is dead (c0 == 0).
    gate_slices = [slice(0, F), slice(2 * F, 3 * F), slice(3 * F, 4 * F)]
    gw = np.zeros((Fp, 3 * Fp), np.float32)
    gb = np.zeros((1, 3 * Fp), np.float32)
    for k, sl in enumerate(gate_slices):
        gw[:F, k * Fp:k * Fp + F] = w_ih[sl].T
        gb[0, k * Fp:k * Fp + F] = b_sum[sl]
    lstm_idx = (add_w(gw), add_b(gb))

    # ---- shared [Linear + Tanh] stack ----------------------------------------
    shared_idx = []
    prev_real, prev_pad = F, Fp
    for w, b in params["shared"]:
        w = np.asarray(w, np.float32)            # (out, in)
        b = np.asarray(b, np.float32)
        assert w.shape[1] == prev_real
        out_real = w.shape[0]
        out_pad = _round_up(out_real, _LANE)
        buf = np.zeros((prev_pad, out_pad), np.float32)
        buf[:prev_real, :out_real] = w.T
        bb = np.zeros((1, out_pad), np.float32)
        bb[0, :out_real] = b
        shared_idx.append((add_w(buf), add_b(bb)))
        prev_real, prev_pad = out_real, out_pad

    pi, vf = params["pi"], params["vf"]
    fuse = len(pi) == len(vf) and len(pi) > 0

    if fuse:
        # One matmul per head layer: layer 0 concatenates pi|vf along 128-
        # aligned output columns, deeper layers are block-diagonal.
        head_idx = []
        pi_idx = vf_idx = None
        p_prev_real, v_prev_real = prev_real, prev_real
        p_prev_pad, v_prev_pad = prev_pad, prev_pad
        first = True
        for (wp, bp), (wv, bv) in zip(pi, vf):
            wp = np.asarray(wp, np.float32); bp = np.asarray(bp, np.float32)
            wv = np.asarray(wv, np.float32); bv = np.asarray(bv, np.float32)
            p_out, v_out = wp.shape[0], wv.shape[0]
            p_out_pad = _round_up(p_out, _LANE)
            v_out_pad = _round_up(v_out, _LANE)
            if first:
                assert wp.shape[1] == prev_real and wv.shape[1] == prev_real
                buf = np.zeros((prev_pad, p_out_pad + v_out_pad), np.float32)
                buf[:prev_real, :p_out] = wp.T
                buf[:prev_real, p_out_pad:p_out_pad + v_out] = wv.T
                first = False
            else:
                assert wp.shape[1] == p_prev_real and wv.shape[1] == v_prev_real
                buf = np.zeros((p_prev_pad + v_prev_pad, p_out_pad + v_out_pad),
                               np.float32)
                buf[:p_prev_real, :p_out] = wp.T
                buf[p_prev_pad:p_prev_pad + v_prev_real,
                    p_out_pad:p_out_pad + v_out] = wv.T
            bb = np.zeros((1, p_out_pad + v_out_pad), np.float32)
            bb[0, :p_out] = bp
            bb[0, p_out_pad:p_out_pad + v_out] = bv
            head_idx.append((add_w(buf), add_b(bb)))
            p_prev_real, v_prev_real = p_out, v_out
            p_prev_pad, v_prev_pad = p_out_pad, v_out_pad
        pi_dim, vf_dim = p_prev_real, v_prev_real
        pi_pad, vf_pad = p_prev_pad, v_prev_pad
    else:
        head_idx = None

        def branch(layers):
            idx, pr, pp = [], prev_real, prev_pad
            for w, b in layers:
                w = np.asarray(w, np.float32); b = np.asarray(b, np.float32)
                assert w.shape[1] == pr
                out_real = w.shape[0]
                out_pad = _round_up(out_real, _LANE)
                buf = np.zeros((pp, out_pad), np.float32)
                buf[:pr, :out_real] = w.T
                bb = np.zeros((1, out_pad), np.float32)
                bb[0, :out_real] = b
                idx.append((add_w(buf), add_b(bb)))
                pr, pp = out_real, out_pad
            return idx, pr, pp

        pi_idx, pi_dim, pi_pad = branch(pi)
        vf_idx, vf_dim, vf_pad = branch(vf)

    out_width = pi_pad + vf_pad

    # ---- build slabs ---------------------------------------------------------
    # Weight slab (dtype configurable): all blocks padded to the common lane
    # width and stacked along rows; every block starts at an 8-aligned row.
    w_width = max(b.shape[1] for b in w_blocks)
    w_offs, padded, rows = [], [], 0
    for blk in w_blocks:
        r, c = blk.shape                        # r is already a multiple of 128
        buf = np.zeros((r, w_width), np.float32)
        buf[:, :c] = blk
        padded.append(buf)
        w_offs.append((rows, r, c))
        rows += r
    wslab = jnp.asarray(np.concatenate(padded, axis=0), dtype=dtype)

    # Bias slab: ALWAYS f32 (no precision loss on a bf16 weight path); each
    # bias owns an 8-row block so its row offset is sublane-tile aligned.
    b_width = max(b.shape[1] for b in b_blocks)
    b_offs, padded, rows = [], [], 0
    for blk in b_blocks:
        c = blk.shape[1]
        buf = np.zeros((_SUB, b_width), np.float32)
        buf[0, :c] = blk[0]
        padded.append(buf)
        b_offs.append((rows, c))
        rows += _SUB
    bslab = jnp.asarray(np.concatenate(padded, axis=0), dtype=jnp.float32)

    meta = dict(F=F, Fp=Fp, lstm=lstm_idx, shared=tuple(shared_idx),
                fuse=fuse, head=head_idx, pi=pi_idx, vf=vf_idx,
                w_offs=tuple(w_offs), b_offs=tuple(b_offs),
                pi_dim=pi_dim, vf_dim=vf_dim, pi_pad=pi_pad, vf_pad=vf_pad,
                out_width=out_width)
    return wslab, bslab, meta


# ---------------------------------------------------------------------------
# Kernel: fused single-step LSTM + shared MLP + fused pi|vf heads, one batch
# tile. All slab slices are static, (8,128)-tile aligned, full lane width.
# ---------------------------------------------------------------------------
def _make_kernel(meta):
    w_offs, b_offs = meta["w_offs"], meta["b_offs"]
    Fp = meta["Fp"]

    def kernel(x_ref, w_ref, b_ref, out_ref):
        wdt = w_ref.dtype    # f32, or bf16 for an MXU-only bf16 path

        def linear(z, wb):
            wi, bi = wb
            r0, r, c = w_offs[wi]
            br0, bc = b_offs[bi]
            y = jnp.dot(z.astype(wdt), w_ref[r0:r0 + r, 0:c],
                        preferred_element_type=jnp.float32)
            return y + b_ref[br0:br0 + 1, 0:bc]          # f32 bias, (1,c) broadcast

        def sigmoid_t(t):
            # sigmoid(x) == 0.5*(1 + tanh(0.5*x)): one EUP push instead of
            # exp + divide (EUP slot is the binding unit at this size).
            return 0.5 * (1.0 + jnp.tanh(0.5 * t))

        x = x_ref[...].astype(jnp.float32)

        # --- LSTM single step from zero state, ONE fused gate matmul ---------
        zg = linear(x, meta["lstm"])                     # (TB, 3*Fp)
        z_i = zg[:, 0 * Fp:1 * Fp]                       # 128-aligned slices: free
        z_g = zg[:, 1 * Fp:2 * Fp]
        z_o = zg[:, 2 * Fp:3 * Fp]
        c = sigmoid_t(z_i) * jnp.tanh(z_g)               # forget gate * c0 == 0
        h = sigmoid_t(z_o) * jnp.tanh(c)                 # padded cols stay exactly 0

        # --- shared [Linear + Tanh] stack -------------------------------------
        z = h
        for wb in meta["shared"]:
            z = jnp.tanh(linear(z, wb))

        # --- pi|vf heads -------------------------------------------------------
        if meta["fuse"]:
            for wb in meta["head"]:
                z = jnp.tanh(linear(z, wb))              # one matmul per fused layer
            out_ref[...] = z.astype(out_ref.dtype)
        else:
            zp = z
            for wb in meta["pi"]:
                zp = jnp.tanh(linear(zp, wb))
            zv = z
            for wb in meta["vf"]:
                zv = jnp.tanh(linear(zv, wb))
            out_ref[...] = jnp.concatenate([zp, zv], axis=-1).astype(out_ref.dtype)

    return kernel


def _per_row_cost(meta):
    w_offs = meta["w_offs"]
    if meta["fuse"]:
        mlp = list(meta["shared"]) + list(meta["head"])
    else:
        mlp = list(meta["shared"]) + list(meta["pi"]) + list(meta["vf"])
    _, gr, gc = w_offs[meta["lstm"][0]]
    flops = 2 * gr * gc                                  # fused gate matmul
    trans = 4 * meta["Fp"]                               # 4 tanh / row for gate math
    for wi, _ in mlp:
        _, r, c = w_offs[wi]
        flops += 2 * r * c
        trans += c
    return flops, trans


# ---------------------------------------------------------------------------
# Wrapper: jitted forward(features, wslab, bslab) -> (latent_pi, latent_vf).
# batch_tile=None -> single grid step (best on single-TC v5e/v6e); on v7x pass
# batch_tile ~= round_up(B/2, 8) so the "parallel" grid splits across both TCs.
# ---------------------------------------------------------------------------
def make_forward(meta, *, batch_tile=None):
    F, Fp = meta["F"], meta["Fp"]
    P, V = meta["pi_dim"], meta["vf_dim"]
    Ppad = meta["pi_pad"]
    OutW = meta["out_width"]
    kernel = _make_kernel(meta)
    flops_row, tr_row = _per_row_cost(meta)

    def forward(features, wslab, bslab):
        B, Fin = features.shape
        assert Fin == F, "feature dim mismatch with packed parameters"

        # Lane-pad the feature dim once (64 -> 128) for an unmasked x DMA path.
        if Fin != Fp:
            features = jnp.pad(features, ((0, 0), (0, Fp - Fin)))

        B8 = _round_up(B, _SUB)
        TB = B8 if batch_tile is None else _round_up(min(batch_tile, B8), _SUB)
        TB = min(TB, 512)        # keep live (TB, 3*Fp) gate activation in vregs
        Bp = _round_up(B8, TB)
        if Bp != B:              # only pads when B % 8 != 0 or TB splits unevenly
            features = jnp.pad(features, ((0, Bp - B), (0, 0)))
        grid = (Bp // TB,)

        w_bytes = int(wslab.size) * np.dtype(wslab.dtype).itemsize
        b_bytes = int(bslab.size) * 4
        cost = pl.CostEstimate(
            flops=flops_row * Bp,
            transcendentals=tr_row * Bp,
            bytes_accessed=(np.dtype(features.dtype).itemsize * Bp * Fp
                            + w_bytes + b_bytes + 4 * Bp * OutW),
        )

        out = pl.pallas_call(
            kernel,
            out_shape=jax.ShapeDtypeStruct((Bp, OutW), jnp.float32),
            grid=grid,
            in_specs=[
                pl.BlockSpec((TB, Fp), lambda i: (i, 0)),       # batch tile
                # Constant index_map -> slabs stay resident across the grid.
                # (For very large nets on v7x's 64 MiB VMEM, consider
                #  pipeline_mode=pl.Buffered(1) + a bf16 weight slab.)
                pl.BlockSpec(wslab.shape, lambda i: (0, 0)),
                pl.BlockSpec(bslab.shape, lambda i: (0, 0)),
            ],
            out_specs=pl.BlockSpec((TB, OutW), lambda i: (i, 0)),
            compiler_params=pltpu.CompilerParams(
                # Batch axis is independent -> v7x's two TensorCores split it
                # when the grid has 2 steps; no-op on single-core v5e/v6e.
                dimension_semantics=("parallel",),
            ),
            cost_estimate=cost,
        )(features, wslab, bslab)

        # pi starts at column 0, vf starts at a 128-aligned column: both slices
        # are lane-tile aligned (no relayout of the kernel output).
        return out[:B, 0:P], out[:B, Ppad:Ppad + V]

    return jax.jit(forward)


# ---------------------------------------------------------------------------
# Pure-JAX reference (full PyTorch gate math, f32) for correctness checking.
# ---------------------------------------------------------------------------
def reference_forward(features, params):
    F = params["w_ih"].shape[1]
    hp = jax.lax.Precision.HIGHEST
    gates = (jnp.dot(features, params["w_ih"].T, precision=hp)
             + params["b_ih"] + params["b_hh"])
    i_g = jax.nn.sigmoid(gates[:, 0 * F:1 * F])
    g_g = jnp.tanh(gates[:, 2 * F:3 * F])
    o_g = jax.nn.sigmoid(gates[:, 3 * F:4 * F])
    c = i_g * g_g                                   # forget gate * c0 == 0
    h = o_g * jnp.tanh(c)

    def mlp(z, layers):
        for w, b in layers:
            z = jnp.tanh(jnp.dot(z, w.T, precision=hp) + b)
        return z

    shared = mlp(h, params["shared"])
    return mlp(shared, params["pi"]), mlp(shared, params["vf"])


# ---------------------------------------------------------------------------
if __name__ == "__main__":
    # Small, module-consistent config:
    #   feature_dim = 64, net_arch = [64, dict(pi=[64, 64], vf=[64, 64])]
    feature_dim = 64
    net_arch = [64, dict(pi=[64, 64], vf=[64, 64])]
    batch = 16

    key = jax.random.PRNGKey(0)
    k_params, k_x = jax.random.split(key)
    params = init_params(k_params, feature_dim, net_arch)
    features = jax.random.normal(k_x, (batch, feature_dim), jnp.float32)

    # f32 weight slab for a tight comparison; pass dtype=jnp.bfloat16 on v6e/v7x
    # to feed the MXU bf16 weights (biases stay f32 in their own slab, and all
    # element-wise gate math stays f32 inside the kernel).
    wslab, bslab, meta = pack_params(params, dtype=jnp.float32)
    forward = make_forward(meta)          # batch_tile=None -> one grid step

    pi_lat, vf_lat = forward(features, wslab, bslab)
    pi_lat, vf_lat = jax.block_until_ready((pi_lat, vf_lat))

    pi_ref, vf_ref = reference_forward(features, params)
    np.testing.assert_allclose(np.asarray(pi_lat), np.asarray(pi_ref),
                               atol=2e-3, rtol=2e-3)
    np.testing.assert_allclose(np.asarray(vf_lat), np.asarray(vf_ref),
                               atol=2e-3, rtol=2e-3)

    print("KERNEL_OK")
</pallas_src>

<mosaic_0001>
module attributes {stable_mosaic.version = 11 : i64} {
  func.func @kernel(%arg0: i32, %arg1: memref<16x128xf32, #tpu.memory_space<vmem>>, %arg2: memref<640x384xf32, #tpu.memory_space<vmem>>, %arg3: memref<32x384xf32, #tpu.memory_space<vmem>>, %arg4: memref<16x256xf32, #tpu.memory_space<vmem>>) attributes {dimension_semantics = [#tpu.dimension_semantics<parallel>], iteration_bounds = array<i64: 1>, scalar_prefetch = 0 : i64, scratch_operands = 0 : i64, tpu.core_type = #tpu.core_type<tc>, window_params = [{transform_indices = @transform_0, window_bounds = array<i64: 16, 128>}, {pipeline_mode = #tpu.pipeline_mode<synchronous>, transform_indices = @transform_1, window_bounds = array<i64: 640, 384>}, {pipeline_mode = #tpu.pipeline_mode<synchronous>, transform_indices = @transform_2, window_bounds = array<i64: 32, 384>}, {transform_indices = @transform_3, window_bounds = array<i64: 16, 256>}]} {
    %c0 = arith.constant 0 : index
    %c0_0 = arith.constant 0 : index
    %0 = vector.load %arg1[%c0, %c0_0] : memref<16x128xf32, #tpu.memory_space<vmem>>, vector<16x128xf32>
    %c0_1 = arith.constant 0 : index
    %c0_2 = arith.constant 0 : index
    %1 = vector.load %arg2[%c0_1, %c0_2] : memref<640x384xf32, #tpu.memory_space<vmem>>, vector<128x384xf32>
    %cst = arith.constant dense<0.000000e+00> : vector<16x384xf32>
    %2 = tpu.matmul %0, %1, %cst {dimension_numbers = #tpu.dot_dimension_numbers<[1], [0], [0], [1], [0, 0, 1, 1], [], []>} : vector<16x128xf32>, vector<128x384xf32>, vector<16x384xf32> -> vector<16x384xf32>
    %c0_3 = arith.constant 0 : index
    %c0_4 = arith.constant 0 : index
    %3 = vector.load %arg3[%c0_3, %c0_4] : memref<32x384xf32, #tpu.memory_space<vmem>>, vector<1x384xf32>
    %4 = vector.broadcast %3 : vector<1x384xf32> to vector<16x384xf32>
    %5 = arith.addf %2, %4 : vector<16x384xf32>
    %6 = vector.extract_strided_slice %5 {offsets = [0, 0], sizes = [16, 128], strides = [1, 1]} : vector<16x384xf32> to vector<16x128xf32>
    %7 = vector.extract_strided_slice %5 {offsets = [0, 128], sizes = [16, 128], strides = [1, 1]} : vector<16x384xf32> to vector<16x128xf32>
    %8 = vector.extract_strided_slice %5 {offsets = [0, 256], sizes = [16, 128], strides = [1, 1]} : vector<16x384xf32> to vector<16x128xf32>
    %cst_5 = arith.constant 5.000000e-01 : f32
    %9 = vector.broadcast %cst_5 : f32 to vector<16x128xf32>
    %10 = arith.mulf %9, %6 : vector<16x128xf32>
    %11 = math.tanh %10 : vector<16x128xf32>
    %cst_6 = arith.constant 1.000000e+00 : f32
    %12 = vector.broadcast %cst_6 : f32 to vector<16x128xf32>
    %13 = arith.addf %12, %11 : vector<16x128xf32>
    %cst_7 = arith.constant 5.000000e-01 : f32
    %14 = vector.broadcast %cst_7 : f32 to vector<16x128xf32>
    %15 = arith.mulf %14, %13 : vector<16x128xf32>
    %16 = math.tanh %7 : vector<16x128xf32>
    %17 = arith.mulf %15, %16 : vector<16x128xf32>
    %cst_8 = arith.constant 5.000000e-01 : f32
    %18 = vector.broadcast %cst_8 : f32 to vector<16x128xf32>
    %19 = arith.mulf %18, %8 : vector<16x128xf32>
    %20 = math.tanh %19 : vector<16x128xf32>
    %cst_9 = arith.constant 1.000000e+00 : f32
    %21 = vector.broadcast %cst_9 : f32 to vector<16x128xf32>
    %22 = arith.addf %21, %20 : vector<16x128xf32>
    %cst_10 = arith.constant 5.000000e-01 : f32
    %23 = vector.broadcast %cst_10 : f32 to vector<16x128xf32>
    %24 = arith.mulf %23, %22 : vector<16x128xf32>
    %25 = math.tanh %17 : vector<16x128xf32>
    %26 = arith.mulf %24, %25 : vector<16x128xf32>
    %c128 = arith.constant 128 : index
    %c0_11 = arith.constant 0 : index
    %27 = vector.load %arg2[%c128, %c0_11] : memref<640x384xf32, #tpu.memory_space<vmem>>, vector<128x128xf32>
    %cst_12 = arith.constant dense<0.000000e+00> : vector<16x128xf32>
    %28 = tpu.matmul %26, %27, %cst_12 {dimension_numbers = #tpu.dot_dimension_numbers<[1], [0], [0], [1], [0, 0, 1, 1], [], []>} : vector<16x128xf32>, vector<128x128xf32>, vector<16x128xf32> -> vector<16x128xf32>
    %c8 = arith.constant 8 : index
    %c0_13 = arith.constant 0 : index
    %29 = vector.load %arg3[%c8, %c0_13] : memref<32x384xf32, #tpu.memory_space<vmem>>, vector<1x128xf32>
    %30 = vector.broadcast %29 : vector<1x128xf32> to vector<16x128xf32>
    %31 = arith.addf %28, %30 : vector<16x128xf32>
    %32 = math.tanh %31 : vector<16x128xf32>
    %c256 = arith.constant 256 : index
    %c0_14 = arith.constant 0 : index
    %33 = vector.load %arg2[%c256, %c0_14] : memref<640x384xf32, #tpu.memory_space<vmem>>, vector<128x256xf32>
    %cst_15 = arith.constant dense<0.000000e+00> : vector<16x256xf32>
    %34 = tpu.matmul %32, %33, %cst_15 {dimension_numbers = #tpu.dot_dimension_numbers<[1], [0], [0], [1], [0, 0, 1, 1], [], []>} : vector<16x128xf32>, vector<128x256xf32>, vector<16x256xf32> -> vector<16x256xf32>
    %c16 = arith.constant 16 : index
    %c0_16 = arith.constant 0 : index
    %35 = vector.load %arg3[%c16, %c0_16] : memref<32x384xf32, #tpu.memory_space<vmem>>, vector<1x256xf32>
    %36 = vector.broadcast %35 : vector<1x256xf32> to vector<16x256xf32>
    %37 = arith.addf %34, %36 : vector<16x256xf32>
    %38 = math.tanh %37 : vector<16x256xf32>
    %c384 = arith.constant 384 : index
    %c0_17 = arith.constant 0 : index
    %39 = vector.load %arg2[%c384, %c0_17] : memref<640x384xf32, #tpu.memory_space<vmem>>, vector<256x256xf32>
    %cst_18 = arith.constant dense<0.000000e+00> : vector<16x256xf32>
    %40 = tpu.matmul %38, %39, %cst_18 {dimension_numbers = #tpu.dot_dimension_numbers<[1], [0], [0], [1], [0, 0, 1, 1], [], []>} : vector<16x256xf32>, vector<256x256xf32>, vector<16x256xf32> -> vector<16x256xf32>
    %c24 = arith.constant 24 : index
    %c0_19 = arith.constant 0 : index
    %41 = vector.load %arg3[%c24, %c0_19] : memref<32x384xf32, #tpu.memory_space<vmem>>, vector<1x256xf32>
    %42 = vector.broadcast %41 : vector<1x256xf32> to vector<16x256xf32>
    %43 = arith.addf %40, %42 : vector<16x256xf32>
    %44 = math.tanh %43 : vector<16x256xf32>
    %c0_20 = arith.constant 0 : index
    %c0_21 = arith.constant 0 : index
    %45 = vector.load %arg4[%c0_20, %c0_21] : memref<16x256xf32, #tpu.memory_space<vmem>>, vector<16x256xf32>
    tpu.vector_store %arg4[%c0_20, %c0_21], %44 {strides = array<i32>} : memref<16x256xf32, #tpu.memory_space<vmem>>, vector<16x256xf32>,
    return
  }
  func.func @transform_0(%arg0: i32) -> (i32, i32) {
    %c0_i32 = arith.constant 0 : i32
    %c0_i32_0 = arith.constant 0 : i32
    return %arg0, %c0_i32 : i32, i32
  }
  func.func @transform_1(%arg0: i32) -> (i32, i32) {
    %c0_i32 = arith.constant 0 : i32
    %c0_i32_0 = arith.constant 0 : i32
    %c0_i32_1 = arith.constant 0 : i32
    return %c0_i32, %c0_i32_0 : i32, i32
  }
  func.func @transform_2(%arg0: i32) -> (i32, i32) {
    %c0_i32 = arith.constant 0 : i32
    %c0_i32_0 = arith.constant 0 : i32
    %c0_i32_1 = arith.constant 0 : i32
    return %c0_i32, %c0_i32_0 : i32, i32
  }
  func.func @transform_3(%arg0: i32) -> (i32, i32) {
    %c0_i32 = arith.constant 0 : i32
    %c0_i32_0 = arith.constant 0 : i32
    return %arg0, %c0_i32 : i32, i32
  }
}

</mosaic_0001>

<llo_original>
// kernel: forward.1
$region0: #{forward.1}
  #allocation0 [shape = 'u32[]', space=smem, size = 0x4, offset = 0x4, fixed_abs, tag = 'smem constant byte address 0x4 - core index']
  #allocation1 [shape = 'u32[144,128]{1,0:T(1,128)}', space=vmem, size = 0x12000, scoped, tag = 'internal scratch']
  %s0 = inlined_call_operand.vmem [shape: f32[16,128], index: 0, kind: input, shape index: {}]
  %s1 = inlined_call_operand.hbm [shape: f32[640,384], index: 1, kind: input, shape index: {}]
  %s2 = inlined_call_operand.hbm [shape: f32[32,384], index: 2, kind: input, shape index: {}]
  %s3 = inlined_call_operand.vmem [shape: f32[16,256], index: 3, kind: output, shape index: {}]
  %s4 = sld [smem:[#allocation0]]
  $region30: #{forward.1} parent=0
    _
  %s6 = ssub.s32 1, %s4
  %s7 = scalar_select 0, %s6, %s4
  $region1: #{forward.1} parent=0
    #allocation2 [shape = 'u8[983040]{0}', space=vmem, size = 0xf0000, scoped, tag = 'input window, operand 1, single buffered']
    #allocation3 [shape = 's32[1]{0}', space=sflag, size = 0x4, scoped, tag = 'scoped memory for forward.1']
    #allocation4 [shape = 'u8[49152]{0}', space=vmem, size = 0xc000, scoped, tag = 'input window, operand 2, single buffered']
    #allocation5 [shape = 's32[1]{0}', space=sflag, size = 0x4, scoped, tag = 'scoped memory for forward.1']
    %8 = vsyncpa [#allocation3], 0
    %9 = vsyncpa [#allocation5], 0
    // Predicated region
    $region2: #{forward.1} parent=1 // pred_check
      _
    $region3: #{forward.1} parent=1 // pred_check_branch
      %11 = sbr.rel (0) target = $region5
    $region4: #{forward.1} parent=1 // pred_region
      _
    $region5: #{forward.1} parent=1 // pred_fallthru
      _
    // Predicated region
    $region6: #{forward.1} parent=1 // pred_check
      _
    $region7: #{forward.1} parent=1 // pred_check_branch
      %13 = sbr.rel (0) target = $region9
    $region8: #{forward.1} parent=1 // pred_region
      %s15 = ssub.s32 30720, 30720
      %16 = vsyncadd [#allocation3], %s15
      %s17 = sshll.u32 [#allocation2], 4
      %s18 = int_to_ptr.vmem [resolvable:$true] %s17
      %23 = dma.hbm_to_vmem [thread:$0]  %s1, 30720, %s18, [#allocation3], 384, 384, 24
    $region9: #{forward.1} parent=1 // pred_fallthru
      _
    // Predicated region
    $region10: #{forward.1} parent=1 // pred_check
      _
    $region11: #{forward.1} parent=1 // pred_check_branch
      %25 = sbr.rel (0) target = $region13
    $region12: #{forward.1} parent=1 // pred_region
      %s27 = ssub.s32 1536, 1536
      %28 = vsyncadd [#allocation5], %s27
      %s29 = sshll.u32 [#allocation4], 4
      %s30 = int_to_ptr.vmem [resolvable:$true] %s29
      %35 = dma.hbm_to_vmem [thread:$0]  %s2, 1536, %s30, [#allocation5], 384, 384, 24
    $region13: #{forward.1} parent=1 // pred_fallthru
      _
    // Predicated region
    $region14: #{forward.1} parent=1 // pred_check
      _
    $region15: #{forward.1} parent=1 // pred_check_branch
      %37 = sbr.rel (0) target = $region17
    $region16: #{forward.1} parent=1 // pred_region
      %38 = dma.done [#allocation3], 30720
    $region17: #{forward.1} parent=1 // pred_fallthru
      _
    // Predicated region
    $region18: #{forward.1} parent=1 // pred_check
      _
    $region19: #{forward.1} parent=1 // pred_check_branch
      %40 = sbr.rel (0) target = $region21
    $region20: #{forward.1} parent=1 // pred_region
      %41 = dma.done [#allocation5], 1536
    $region21: #{forward.1} parent=1 // pred_fallthru
      _
    %v42 = vld [vmem:[%s0] sm:$0xff]
    %v43 = vld [vmem:[%s0 + $0x8] sm:$0xff]
    %v44 = vld [vmem:[#allocation2] sm:$0xff]
    %v45 = vld [vmem:[#allocation2 + $0x8] sm:$0xff]
    %v46 = vld [vmem:[#allocation2 + $0x10] sm:$0xff]
    %v47 = vld [vmem:[#allocation2 + $0x18] sm:$0xff]
    %v48 = vld [vmem:[#allocation2 + $0x20] sm:$0xff]
    %v49 = vld [vmem:[#allocation2 + $0x28] sm:$0xff]
    %v50 = vld [vmem:[#allocation2 + $0x30] sm:$0xff]
    %v51 = vld [vmem:[#allocation2 + $0x38] sm:$0xff]
    %v52 = vld [vmem:[#allocation2 + $0x40] sm:$0xff]
    %v53 = vld [vmem:[#allocation2 + $0x48] sm:$0xff]
    %v54 = vld [vmem:[#allocation2 + $0x50] sm:$0xff]
    %v55 = vld [vmem:[#allocation2 + $0x58] sm:$0xff]
    %v56 = vld [vmem:[#allocation2 + $0x60] sm:$0xff]
    %v57 = vld [vmem:[#allocation2 + $0x68] sm:$0xff]
    %v58 = vld [vmem:[#allocation2 + $0x70] sm:$0xff]
    %v59 = vld [vmem:[#allocation2 + $0x78] sm:$0xff]
    %v60 = vld [vmem:[#allocation2 + $0x80] sm:$0xff]
    %v61 = vld [vmem:[#allocation2 + $0x88] sm:$0xff]
    %v62 = vld [vmem:[#allocation2 + $0x90] sm:$0xff]
    %v63 = vld [vmem:[#allocation2 + $0x98] sm:$0xff]
    %v64 = vld [vmem:[#allocation2 + $0xa0] sm:$0xff]
    %v65 = vld [vmem:[#allocation2 + $0xa8] sm:$0xff]
    %v66 = vld [vmem:[#allocation2 + $0xb0] sm:$0xff]
    %v67 = vld [vmem:[#allocation2 + $0xb8] sm:$0xff]
    %v68 = vld [vmem:[#allocation2 + $0xc0] sm:$0xff]
    %v69 = vld [vmem:[#allocation2 + $0xc8] sm:$0xff]
    %v70 = vld [vmem:[#allocation2 + $0xd0] sm:$0xff]
    %v71 = vld [vmem:[#allocation2 + $0xd8] sm:$0xff]
    %v72 = vld [vmem:[#allocation2 + $0xe0] sm:$0xff]
    %v73 = vld [vmem:[#allocation2 + $0xe8] sm:$0xff]
    %v74 = vld [vmem:[#allocation2 + $0xf0] sm:$0xff]
    %v75 = vld [vmem:[#allocation2 + $0xf8] sm:$0xff]
    %v76 = vld [vmem:[#allocation2 + $0x100] sm:$0xff]
    %v77 = vld [vmem:[#allocation2 + $0x108] sm:$0xff]
    %v78 = vld [vmem:[#allocation2 + $0x110] sm:$0xff]
    %v79 = vld [vmem:[#allocation2 + $0x118] sm:$0xff]
    %v80 = vld [vmem:[#allocation2 + $0x120] sm:$0xff]
    %v81 = vld [vmem:[#allocation2 + $0x128] sm:$0xff]
    %v82 = vld [vmem:[#allocation2 + $0x130] sm:$0xff]
    %v83 = vld [vmem:[#allocation2 + $0x138] sm:$0xff]
    %v84 = vld [vmem:[#allocation2 + $0x140] sm:$0xff]
    %v85 = vld [vmem:[#allocation2 + $0x148] sm:$0xff]
    %v86 = vld [vmem:[#allocation2 + $0x150] sm:$0xff]
    %v87 = vld [vmem:[#allocation2 + $0x158] sm:$0xff]
    %v88 = vld [vmem:[#allocation2 + $0x160] sm:$0xff]
    %v89 = vld [vmem:[#allocation2 + $0x168] sm:$0xff]
    %v90 = vld [vmem:[#allocation2 + $0x170] sm:$0xff]
    %v91 = vld [vmem:[#allocation2 + $0x178] sm:$0xff]
    %v92 = vld [vmem:[#allocation4] ss:$8 sm:$0x7]
    %v94 = vlaneseq
    %v95 = vshrl.u32 %v94, 7
    %v96 = vsub.s32 0, %v95
    %v97 = vrot.slane %v92, %v96
    %v98 = vlaneseq
    %v99 = vshrl.u32 %v98, 7
    %v100 = vsub.s32 1, %v99
    %v101 = vrot.slane %v92, %v100
    %v102 = vlaneseq
    %v103 = vshrl.u32 %v102, 7
    %v104 = vsub.s32 2, %v103
    %v105 = vrot.slane %v92, %v104
    %109 = vmatprep.subr.mxu0 %v45
    %110 = vmatpush1.msra.mxu0 %v44
    %111 = vmatprep.subr.mxu0 %v48
    %112 = vmatpush1.msra.mxu0 %v47
    %113 = vmatprep.subr.mxu0 %v51
    %114 = vmatpush1.msra.mxu0 %v50
    %115 = vmatprep.subr.mxu0 %v54
    %116 = vmatpush1.msra.mxu0 %v53
    %117 = vmatprep.subr.mxu0 %v57
    %118 = vmatpush1.msra.mxu0 %v56
    %119 = vmatprep.subr.mxu0 %v60
    %120 = vmatpush1.msra.mxu0 %v59
    %121 = vmatprep.subr.mxu0 %v63
    %122 = vmatpush1.msra.mxu0 %v62
    %123 = vmatprep.subr.mxu0 %v66
    %124 = vmatpush1.msra.mxu0 %v65
    %125 = vmatprep.subr.mxu0 %v69
    %126 = vmatpush1.msra.mxu0 %v68
    %127 = vmatprep.subr.mxu0 %v72
    %128 = vmatpush1.msra.mxu0 %v71
    %129 = vmatprep.subr.mxu0 %v75
    %130 = vmatpush1.msra.mxu0 %v74
    %131 = vmatprep.subr.mxu0 %v78
    %132 = vmatpush1.msra.mxu0 %v77
    %133 = vmatprep.subr.mxu0 %v81
    %134 = vmatpush1.msra.mxu0 %v80
    %135 = vmatprep.subr.mxu0 %v84
    %136 = vmatpush1.msra.mxu0 %v83
    %137 = vmatprep.subr.mxu0 %v87
    %138 = vmatpush1.msra.mxu0 %v86
    %139 = vmatprep.subr.mxu0 %v90
    %140 = vmatpush1.msra.mxu0 %v89
    %141 = vmatprep.subr.mxu0 0.0
    %142 = vmatpush1.msra.mxu0 0.0
    %143 = vmatprep.subr.mxu0 0.0
    %144 = vmatpush1.msra.mxu0 0.0
    %145 = vmatprep.subr.mxu0 0.0
    %146 = vmatpush1.msra.mxu0 0.0
    %147 = vmatprep.subr.mxu0 0.0
    %148 = vmatpush1.msra.mxu0 0.0
    %149 = vmatprep.subr.mxu0 0.0
    %150 = vmatpush1.msra.mxu0 0.0
    %151 = vmatprep.subr.mxu0 0.0
    %152 = vmatpush1.msra.mxu0 0.0
    %153 = vmatprep.subr.mxu0 0.0
    %154 = vmatpush1.msra.mxu0 0.0
    %155 = vmatprep.subr.mxu0 0.0
    %156 = vmatpush1.msra.mxu0 0.0
    %157 = vmatprep.subr.mxu0 0.0
    %158 = vmatpush1.msra.mxu0 0.0
    %159 = vmatprep.subr.mxu0 0.0
    %160 = vmatpush1.msra.mxu0 0.0
    %161 = vmatprep.subr.mxu0 0.0
    %162 = vmatpush1.msra.mxu0 0.0
    %163 = vmatprep.subr.mxu0 0.0
    %164 = vmatpush1.msra.mxu0 0.0
    %165 = vmatprep.subr.mxu0 0.0
    %166 = vmatpush1.msra.mxu0 0.0
    %167 = vmatprep.subr.mxu0 0.0
    %168 = vmatpush1.msra.mxu0 0.0
    %169 = vmatprep.subr.mxu0 0.0
    %170 = vmatpush1.msra.mxu0 0.0
    %171 = vmatprep.subr.mxu0 0.0
    %172 = vmatpush1.msra.mxu0 0.0
    %173 = vmatprep.mubr.f32.mxu0 0.0
    %174 = vmatmul.mubr.f32.gmra.mrb[0].mxu0 %v42
    %v175 = vpop.f32.mrb[0].mxu0
    %v176 = vadd.f32 %v97, %v175
    %v177 = vpop.f32.mrb[0].mxu0
    %v178 = vadd.f32 %v101, %v177
    %179 = vmatprep.mubr.f32.mxu0 0.0
    %180 = vmatmul.mubr.f32.gmra.mrb[0].mxu0 %v43
    %v181 = vpop.f32.mrb[0].mxu0
    %v182 = vadd.f32 %v97, %v181
    %v183 = vpop.f32.mrb[0].mxu0
    %v184 = vadd.f32 %v101, %v183
    %185 = vdwg.mxu0
    %186 = vmatprep.subr.mxu0 0.0
    %187 = vmatpush1.msra.mxu0 %v46
    %188 = vmatprep.subr.mxu0 0.0
    %189 = vmatpush1.msra.mxu0 %v49
    %190 = vmatprep.subr.mxu0 0.0
    %191 = vmatpush1.msra.mxu0 %v52
    %192 = vmatprep.subr.mxu0 0.0
    %193 = vmatpush1.msra.mxu0 %v55
    %194 = vmatprep.subr.mxu0 0.0
    %195 = vmatpush1.msra.mxu0 %v58
    %196 = vmatprep.subr.mxu0 0.0
    %197 = vmatpush1.msra.mxu0 %v61
    %198 = vmatprep.subr.mxu0 0.0
    %199 = vmatpush1.msra.mxu0 %v64
    %200 = vmatprep.subr.mxu0 0.0
    %201 = vmatpush1.msra.mxu0 %v67
    %202 = vmatprep.subr.mxu0 0.0
    %203 = vmatpush1.msra.mxu0 %v70
    %204 = vmatprep.subr.mxu0 0.0
    %205 = vmatpush1.msra.mxu0 %v73
    %206 = vmatprep.subr.mxu0 0.0
    %207 = vmatpush1.msra.mxu0 %v76
    %208 = vmatprep.subr.mxu0 0.0
    %209 = vmatpush1.msra.mxu0 %v79
    %210 = vmatprep.subr.mxu0 0.0
    %211 = vmatpush1.msra.mxu0 %v82
    %212 = vmatprep.subr.mxu0 0.0
    %213 = vmatpush1.msra.mxu0 %v85
    %214 = vmatprep.subr.mxu0 0.0
    %215 = vmatpush1.msra.mxu0 %v88
    %216 = vmatprep.subr.mxu0 0.0
    %217 = vmatpush1.msra.mxu0 %v91
    %218 = vmatprep.subr.mxu0 0.0
    %219 = vmatpush1.msra.mxu0 0.0
    %220 = vmatprep.subr.mxu0 0.0
    %221 = vmatpush1.msra.mxu0 0.0
    %222 = vmatprep.subr.mxu0 0.0
    %223 = vmatpush1.msra.mxu0 0.0
    %224 = vmatprep.subr.mxu0 0.0
    %225 = vmatpush1.msra.mxu0 0.0
    %226 = vmatprep.subr.mxu0 0.0
    %227 = vmatpush1.msra.mxu0 0.0
    %228 = vmatprep.subr.mxu0 0.0
    %229 = vmatpush1.msra.mxu0 0.0
    %230 = vmatprep.subr.mxu0 0.0
    %231 = vmatpush1.msra.mxu0 0.0
    %232 = vmatprep.subr.mxu0 0.0
    %233 = vmatpush1.msra.mxu0 0.0
    %234 = vmatprep.subr.mxu0 0.0
    %235 = vmatpush1.msra.mxu0 0.0
    %236 = vmatprep.subr.mxu0 0.0
    %237 = vmatpush1.msra.mxu0 0.0
    %238 = vmatprep.subr.mxu0 0.0
    %239 = vmatpush1.msra.mxu0 0.0
    %240 = vmatprep.subr.mxu0 0.0
    %241 = vmatpush1.msra.mxu0 0.0
    %242 = vmatprep.subr.mxu0 0.0
    %243 = vmatpush1.msra.mxu0 0.0
    %244 = vmatprep.subr.mxu0 0.0
    %245 = vmatpush1.msra.mxu0 0.0
    %246 = vmatprep.subr.mxu0 0.0
    %247 = vmatpush1.msra.mxu0 0.0
    %248 = vmatprep.subr.mxu0 0.0
    %249 = vmatpush1.msra.mxu0 0.0
    %250 = vmatprep.mubr.f32.mxu0 0.0
    %251 = vmatmul.mubr.f32.gmra.mrb[0].mxu0 %v42
    %v252 = vpop.f32.mrb[0].mxu0
    %v253 = vadd.f32 %v105, %v252
    %v254 = vpop.f32.mrb[0].mxu0
    %255 = vmatprep.mubr.f32.mxu0 0.0
    %256 = vmatmul.mubr.f32.gmra.mrb[0].mxu0 %v43
    %v257 = vpop.f32.mrb[0].mxu0
    %v258 = vadd.f32 %v105, %v257
    %v259 = vpop.f32.mrb[0].mxu0
    %260 = vdwg.mxu0
    %v261 = vmul.f32 %v176, 0.5
    %v262 = vmul.f32 %v182, 0.5
    %v263 = vtanh.pop %v261
    %v264 = vtanh.pop %v262
    %v265 = vadd.f32 %v263, 1.0
    %v266 = vadd.f32 %v264, 1.0
    %v267 = vmul.f32 %v265, 0.5
    %v268 = vmul.f32 %v266, 0.5
    %v269 = vtanh.pop %v178
    %v270 = vtanh.pop %v184
    %v271 = vmul.f32 %v267, %v269
    %v272 = vmul.f32 %v268, %v270
    %v273 = vmul.f32 %v253, 0.5
    %v274 = vmul.f32 %v258, 0.5
    %v275 = vtanh.pop %v273
    %v276 = vtanh.pop %v274
    %v277 = vadd.f32 %v275, 1.0
    %v278 = vadd.f32 %v276, 1.0
    %v279 = vmul.f32 %v277, 0.5
    %v280 = vmul.f32 %v278, 0.5
    %v281 = vtanh.pop %v271
    %v282 = vtanh.pop %v272
    %v283 = vmul.f32 %v279, %v281
    %v284 = vmul.f32 %v280, %v282
    %v285 = vld [vmem:[#allocation2 + $0x180] sm:$0xff]
    %v286 = vld [vmem:[#allocation2 + $0x198] sm:$0xff]
    %v287 = vld [vmem:[#allocation2 + $0x1b0] sm:$0xff]
    %v288 = vld [vmem:[#allocation2 + $0x1c8] sm:$0xff]
    %v289 = vld [vmem:[#allocation2 + $0x1e0] sm:$0xff]
    %v290 = vld [vmem:[#allocation2 + $0x1f8] sm:$0xff]
    %v291 = vld [vmem:[#allocation2 + $0x210] sm:$0xff]
    %v292 = vld [vmem:[#allocation2 + $0x228] sm:$0xff]
    %v293 = vld [vmem:[#allocation2 + $0x240] sm:$0xff]
    %v294 = vld [vmem:[#allocation2 + $0x258] sm:$0xff]
    %v295 = vld [vmem:[#allocation2 + $0x270] sm:$0xff]
    %v296 = vld [vmem:[#allocation2 + $0x288] sm:$0xff]
    %v297 = vld [vmem:[#allocation2 + $0x2a0] sm:$0xff]
    %v298 = vld [vmem:[#allocation2 + $0x2b8] sm:$0xff]
    %v299 = vld [vmem:[#allocation2 + $0x2d0] sm:$0xff]
    %v300 = vld [vmem:[#allocation2 + $0x2e8] sm:$0xff]
    %v301 = vld [vmem:[#allocation4 + $0x18] ss:$0 sm:$0xff]
    %302 = vmatprep.subr.mxu0 0.0
    %303 = vmatpush1.msra.mxu0 %v285
    %304 = vmatprep.subr.mxu0 0.0
    %305 = vmatpush1.msra.mxu0 %v286
    %306 = vmatprep.subr.mxu0 0.0
    %307 = vmatpush1.msra.mxu0 %v287
    %308 = vmatprep.subr.mxu0 0.0
    %309 = vmatpush1.msra.mxu0 %v288
    %310 = vmatprep.subr.mxu0 0.0
    %311 = vmatpush1.msra.mxu0 %v289
    %312 = vmatprep.subr.mxu0 0.0
    %313 = vmatpush1.msra.mxu0 %v290
    %314 = vmatprep.subr.mxu0 0.0
    %315 = vmatpush1.msra.mxu0 %v291
    %316 = vmatprep.subr.mxu0 0.0
    %317 = vmatpush1.msra.mxu0 %v292
    %318 = vmatprep.subr.mxu0 0.0
    %319 = vmatpush1.msra.mxu0 %v293
    %320 = vmatprep.subr.mxu0 0.0
    %321 = vmatpush1.msra.mxu0 %v294
    %322 = vmatprep.subr.mxu0 0.0
    %323 = vmatpush1.msra.mxu0 %v295
    %324 = vmatprep.subr.mxu0 0.0
    %325 = vmatpush1.msra.mxu0 %v296
    %326 = vmatprep.subr.mxu0 0.0
    %327 = vmatpush1.msra.mxu0 %v297
    %328 = vmatprep.subr.mxu0 0.0
    %329 = vmatpush1.msra.mxu0 %v298
    %330 = vmatprep.subr.mxu0 0.0
    %331 = vmatpush1.msra.mxu0 %v299
    %332 = vmatprep.subr.mxu0 0.0
    %333 = vmatpush1.msra.mxu0 %v300
    %334 = vmatprep.subr.mxu0 0.0
    %335 = vmatpush1.msra.mxu0 0.0
    %336 = vmatprep.subr.mxu0 0.0
    %337 = vmatpush1.msra.mxu0 0.0
    %338 = vmatprep.subr.mxu0 0.0
    %339 = vmatpush1.msra.mxu0 0.0
    %340 = vmatprep.subr.mxu0 0.0
    %341 = vmatpush1.msra.mxu0 0.0
    %342 = vmatprep.subr.mxu0 0.0
    %343 = vmatpush1.msra.mxu0 0.0
    %344 = vmatprep.subr.mxu0 0.0
    %345 = vmatpush1.msra.mxu0 0.0
    %346 = vmatprep.subr.mxu0 0.0
    %347 = vmatpush1.msra.mxu0 0.0
    %348 = vmatprep.subr.mxu0 0.0
    %349 = vmatpush1.msra.mxu0 0.0
    %350 = vmatprep.subr.mxu0 0.0
    %351 = vmatpush1.msra.mxu0 0.0
    %352 = vmatprep.subr.mxu0 0.0
    %353 = vmatpush1.msra.mxu0 0.0
    %354 = vmatprep.subr.mxu0 0.0
    %355 = vmatpush1.msra.mxu0 0.0
    %356 = vmatprep.subr.mxu0 0.0
    %357 = vmatpush1.msra.mxu0 0.0
    %358 = vmatprep.subr.mxu0 0.0
    %359 = vmatpush1.msra.mxu0 0.0
    %360 = vmatprep.subr.mxu0 0.0
    %361 = vmatpush1.msra.mxu0 0.0
    %362 = vmatprep.subr.mxu0 0.0
    %363 = vmatpush1.msra.mxu0 0.0
    %364 = vmatprep.subr.mxu0 0.0
    %365 = vmatpush1.msra.mxu0 0.0
    %366 = vmatprep.mubr.f32.mxu0 0.0
    %367 = vmatmul.mubr.f32.gmra.mrb[0].mxu0 %v283
    %v368 = vpop.f32.mrb[0].mxu0
    %v369 = vadd.f32 %v301, %v368
    %v370 = vpop.f32.mrb[0].mxu0
    %371 = vmatprep.mubr.f32.mxu0 0.0
    %372 = vmatmul.mubr.f32.gmra.mrb[0].mxu0 %v284
    %v373 = vpop.f32.mrb[0].mxu0
    %v374 = vadd.f32 %v301, %v373
    %v375 = vpop.f32.mrb[0].mxu0
    %376 = vdwg.mxu0
    %v377 = vtanh.pop %v369
    %v378 = vtanh.pop %v374
    %v379 = vld [vmem:[#allocation2 + $0x300] sm:$0xff]
    %v380 = vld [vmem:[#allocation2 + $0x308] sm:$0xff]
    %v381 = vld [vmem:[#allocation2 + $0x318] sm:$0xff]
    %v382 = vld [vmem:[#allocation2 + $0x320] sm:$0xff]
    %v383 = vld [vmem:[#allocation2 + $0x330] sm:$0xff]
    %v384 = vld [vmem:[#allocation2 + $0x338] sm:$0xff]
    %v385 = vld [vmem:[#allocation2 + $0x348] sm:$0xff]
    %v386 = vld [vmem:[#allocation2 + $0x350] sm:$0xff]
    %v387 = vld [vmem:[#allocation2 + $0x360] sm:$0xff]
    %v388 = vld [vmem:[#allocation2 + $0x368] sm:$0xff]
    %v389 = vld [vmem:[#allocation2 + $0x378] sm:$0xff]
    %v390 = vld [vmem:[#allocation2 + $0x380] sm:$0xff]
    %v391 = vld [vmem:[#allocation2 + $0x390] sm:$0xff]
    %v392 = vld [vmem:[#allocation2 + $0x398] sm:$0xff]
    %v393 = vld [vmem:[#allocation2 + $0x3a8] sm:$0xff]
    %v394 = vld [vmem:[#allocation2 + $0x3b0] sm:$0xff]
    %v395 = vld [vmem:[#allocation2 + $0x3c0] sm:$0xff]
    %v396 = vld [vmem:[#allocation2 + $0x3c8] sm:$0xff]
    %v397 = vld [vmem:[#allocation2 + $0x3d8] sm:$0xff]
    %v398 = vld [vmem:[#allocation2 + $0x3e0] sm:$0xff]
    %v399 = vld [vmem:[#allocation2 + $0x3f0] sm:$0xff]
    %v400 = vld [vmem:[#allocation2 + $0x3f8] sm:$0xff]
    %v401 = vld [vmem:[#allocation2 + $0x408] sm:$0xff]
    %v402 = vld [vmem:[#allocation2 + $0x410] sm:$0xff]
    %v403 = vld [vmem:[#allocation2 + $0x420] sm:$0xff]
    %v404 = vld [vmem:[#allocation2 + $0x428] sm:$0xff]
    %v405 = vld [vmem:[#allocation2 + $0x438] sm:$0xff]
    %v406 = vld [vmem:[#allocation2 + $0x440] sm:$0xff]
    %v407 = vld [vmem:[#allocation2 + $0x450] sm:$0xff]
    %v408 = vld [vmem:[#allocation2 + $0x458] sm:$0xff]
    %v409 = vld [vmem:[#allocation2 + $0x468] sm:$0xff]
    %v410 = vld [vmem:[#allocation2 + $0x470] sm:$0xff]
    %s411 = scalar_lea.vmem [#allocation4], 48
    %v412 = vld [vmem:[%s411] ss:$8 sm:$0x3]
    %v414 = vlaneseq
    %v415 = vshrl.u32 %v414, 7
    %v416 = vsub.s32 0, %v415
    %v417 = vrot.slane %v412, %v416
    %v418 = vlaneseq
    %v419 = vshrl.u32 %v418, 7
    %v420 = vsub.s32 1, %v419
    %v421 = vrot.slane %v412, %v420
    %424 = vmatprep.subr.mxu0 %v380
    %425 = vmatpush1.msra.mxu0 %v379
    %426 = vmatprep.subr.mxu0 %v382
    %427 = vmatpush1.msra.mxu0 %v381
    %428 = vmatprep.subr.mxu0 %v384
    %429 = vmatpush1.msra.mxu0 %v383
    %430 = vmatprep.subr.mxu0 %v386
    %431 = vmatpush1.msra.mxu0 %v385
    %432 = vmatprep.subr.mxu0 %v388
    %433 = vmatpush1.msra.mxu0 %v387
    %434 = vmatprep.subr.mxu0 %v390
    %435 = vmatpush1.msra.mxu0 %v389
    %436 = vmatprep.subr.mxu0 %v392
    %437 = vmatpush1.msra.mxu0 %v391
    %438 = vmatprep.subr.mxu0 %v394
    %439 = vmatpush1.msra.mxu0 %v393
    %440 = vmatprep.subr.mxu0 %v396
    %441 = vmatpush1.msra.mxu0 %v395
    %442 = vmatprep.subr.mxu0 %v398
    %443 = vmatpush1.msra.mxu0 %v397
    %444 = vmatprep.subr.mxu0 %v400
    %445 = vmatpush1.msra.mxu0 %v399
    %446 = vmatprep.subr.mxu0 %v402
    %447 = vmatpush1.msra.mxu0 %v401
    %448 = vmatprep.subr.mxu0 %v404
    %449 = vmatpush1.msra.mxu0 %v403
    %450 = vmatprep.subr.mxu0 %v406
    %451 = vmatpush1.msra.mxu0 %v405
    %452 = vmatprep.subr.mxu0 %v408
    %453 = vmatpush1.msra.mxu0 %v407
    %454 = vmatprep.subr.mxu0 %v410
    %455 = vmatpush1.msra.mxu0 %v409
    %456 = vmatprep.subr.mxu0 0.0
    %457 = vmatpush1.msra.mxu0 0.0
    %458 = vmatprep.subr.mxu0 0.0
    %459 = vmatpush1.msra.mxu0 0.0
    %460 = vmatprep.subr.mxu0 0.0
    %461 = vmatpush1.msra.mxu0 0.0
    %462 = vmatprep.subr.mxu0 0.0
    %463 = vmatpush1.msra.mxu0 0.0
    %464 = vmatprep.subr.mxu0 0.0
    %465 = vmatpush1.msra.mxu0 0.0
    %466 = vmatprep.subr.mxu0 0.0
    %467 = vmatpush1.msra.mxu0 0.0
    %468 = vmatprep.subr.mxu0 0.0
    %469 = vmatpush1.msra.mxu0 0.0
    %470 = vmatprep.subr.mxu0 0.0
    %471 = vmatpush1.msra.mxu0 0.0
    %472 = vmatprep.subr.mxu0 0.0
    %473 = vmatpush1.msra.mxu0 0.0
    %474 = vmatprep.subr.mxu0 0.0
    %475 = vmatpush1.msra.mxu0 0.0
    %476 = vmatprep.subr.mxu0 0.0
    %477 = vmatpush1.msra.mxu0 0.0
    %478 = vmatprep.subr.mxu0 0.0
    %479 = vmatpush1.msra.mxu0 0.0
    %480 = vmatprep.subr.mxu0 0.0
    %481 = vmatpush1.msra.mxu0 0.0
    %482 = vmatprep.subr.mxu0 0.0
    %483 = vmatpush1.msra.mxu0 0.0
    %484 = vmatprep.subr.mxu0 0.0
    %485 = vmatpush1.msra.mxu0 0.0
    %486 = vmatprep.subr.mxu0 0.0
    %487 = vmatpush1.msra.mxu0 0.0
    %488 = vmatprep.mubr.f32.mxu0 0.0
    %489 = vmatmul.mubr.f32.gmra.mrb[0].mxu0 %v377
    %v490 = vpop.f32.mrb[0].mxu0
    %v491 = vadd.f32 %v417, %v490
    %v492 = vpop.f32.mrb[0].mxu0
    %v493 = vadd.f32 %v421, %v492
    %494 = vmatprep.mubr.f32.mxu0 0.0
    %495 = vmatmul.mubr.f32.gmra.mrb[0].mxu0 %v378
    %v496 = vpop.f32.mrb[0].mxu0
    %v497 = vadd.f32 %v417, %v496
    %v498 = vpop.f32.mrb[0].mxu0
    %v499 = vadd.f32 %v421, %v498
    %500 = vdwg.mxu0
    %v501 = vtanh.pop %v491
    %v502 = vtanh.pop %v493
    %v503 = vtanh.pop %v497
    %v504 = vtanh.pop %v499
    %v505 = vld [vmem:[#allocation2 + $0x480] sm:$0xff]
    %v506 = vld [vmem:[#allocation2 + $0x488] sm:$0xff]
    %v507 = vld [vmem:[#allocation2 + $0x498] sm:$0xff]
    %v508 = vld [vmem:[#allocation2 + $0x4a0] sm:$0xff]
    %v509 = vld [vmem:[#allocation2 + $0x4b0] sm:$0xff]
    %v510 = vld [vmem:[#allocation2 + $0x4b8] sm:$0xff]
    %v511 = vld [vmem:[#allocation2 + $0x4c8] sm:$0xff]
    %v512 = vld [vmem:[#allocation2 + $0x4d0] sm:$0xff]
    %v513 = vld [vmem:[#allocation2 + $0x4e0] sm:$0xff]
    %v514 = vld [vmem:[#allocation2 + $0x4e8] sm:$0xff]
    %v515 = vld [vmem:[#allocation2 + $0x4f8] sm:$0xff]
    %v516 = vld [vmem:[#allocation2 + $0x500] sm:$0xff]
    %v517 = vld [vmem:[#allocation2 + $0x510] sm:$0xff]
    %v518 = vld [vmem:[#allocation2 + $0x518] sm:$0xff]
    %v519 = vld [vmem:[#allocation2 + $0x528] sm:$0xff]
    %v520 = vld [vmem:[#allocation2 + $0x530] sm:$0xff]
    %v521 = vld [vmem:[#allocation2 + $0x540] sm:$0xff]
    %v522 = vld [vmem:[#allocation2 + $0x548] sm:$0xff]
    %v523 = vld [vmem:[#allocation2 + $0x558] sm:$0xff]
    %v524 = vld [vmem:[#allocation2 + $0x560] sm:$0xff]
    %v525 = vld [vmem:[#allocation2 + $0x570] sm:$0xff]
    %v526 = vld [vmem:[#allocation2 + $0x578] sm:$0xff]
    %v527 = vld [vmem:[#allocation2 + $0x588] sm:$0xff]
    %v528 = vld [vmem:[#allocation2 + $0x590] sm:$0xff]
    %v529 = vld [vmem:[#allocation2 + $0x5a0] sm:$0xff]
    %v530 = vld [vmem:[#allocation2 + $0x5a8] sm:$0xff]
    %v531 = vld [vmem:[#allocation2 + $0x5b8] sm:$0xff]
    %v532 = vld [vmem:[#allocation2 + $0x5c0] sm:$0xff]
    %v533 = vld [vmem:[#allocation2 + $0x5d0] sm:$0xff]
    %v534 = vld [vmem:[#allocation2 + $0x5d8] sm:$0xff]
    %v535 = vld [vmem:[#allocation2 + $0x5e8] sm:$0xff]
    %v536 = vld [vmem:[#allocation2 + $0x5f0] sm:$0xff]
    %v537 = vld [vmem:[#allocation2 + $0x600] sm:$0xff]
    %v538 = vld [vmem:[#allocation2 + $0x608] sm:$0xff]
    %v539 = vld [vmem:[#allocation2 + $0x618] sm:$0xff]
    %v540 = vld [vmem:[#allocation2 + $0x620] sm:$0xff]
    %v541 = vld [vmem:[#allocation2 + $0x630] sm:$0xff]
    %v542 = vld [vmem:[#allocation2 + $0x638] sm:$0xff]
    %v543 = vld [vmem:[#allocation2 + $0x648] sm:$0xff]
    %v544 = vld [vmem:[#allocation2 + $0x650] sm:$0xff]
    %v545 = vld [vmem:[#allocation2 + $0x660] sm:$0xff]
    %v546 = vld [vmem:[#allocation2 + $0x668] sm:$0xff]
    %v547 = vld [vmem:[#allocation2 + $0x678] sm:$0xff]
    %v548 = vld [vmem:[#allocation2 + $0x680] sm:$0xff]
    %v549 = vld [vmem:[#allocation2 + $0x690] sm:$0xff]
    %v550 = vld [vmem:[#allocation2 + $0x698] sm:$0xff]
    %v551 = vld [vmem:[#allocation2 + $0x6a8] sm:$0xff]
    %v552 = vld [vmem:[#allocation2 + $0x6b0] sm:$0xff]
    %v553 = vld [vmem:[#allocation2 + $0x6c0] sm:$0xff]
    %v554 = vld [vmem:[#allocation2 + $0x6c8] sm:$0xff]
    %v555 = vld [vmem:[#allocation2 + $0x6d8] sm:$0xff]
    %v556 = vld [vmem:[#allocation2 + $0x6e0] sm:$0xff]
    %v557 = vld [vmem:[#allocation2 + $0x6f0] sm:$0xff]
    %v558 = vld [vmem:[#allocation2 + $0x6f8] sm:$0xff]
    %v559 = vld [vmem:[#allocation2 + $0x708] sm:$0xff]
    %v560 = vld [vmem:[#allocation2 + $0x710] sm:$0xff]
    %v561 = vld [vmem:[#allocation2 + $0x720] sm:$0xff]
    %v562 = vld [vmem:[#allocation2 + $0x728] sm:$0xff]
    %v563 = vld [vmem:[#allocation2 + $0x738] sm:$0xff]
    %v564 = vld [vmem:[#allocation2 + $0x740] sm:$0xff]
    %v565 = vld [vmem:[#allocation2 + $0x750] sm:$0xff]
    %v566 = vld [vmem:[#allocation2 + $0x758] sm:$0xff]
    %v567 = vld [vmem:[#allocation2 + $0x768] sm:$0xff]
    %v568 = vld [vmem:[#allocation2 + $0x770] sm:$0xff]
    %s569 = scalar_lea.vmem [#allocation4], 72
    %v570 = vld [vmem:[%s569] ss:$8 sm:$0x3]
    %v572 = vlaneseq
    %v573 = vshrl.u32 %v572, 7
    %v574 = vsub.s32 0, %v573
    %v575 = vrot.slane %v570, %v574
    %v576 = vlaneseq
    %v577 = vshrl.u32 %v576, 7
    %v578 = vsub.s32 1, %v577
    %v579 = vrot.slane %v570, %v578
    %582 = vmatprep.subr.mxu0 %v506
    %583 = vmatpush1.msra.mxu0 %v505
    %584 = vmatprep.subr.mxu0 %v508
    %585 = vmatpush1.msra.mxu0 %v507
    %586 = vmatprep.subr.mxu0 %v510
    %587 = vmatpush1.msra.mxu0 %v509
    %588 = vmatprep.subr.mxu0 %v512
    %589 = vmatpush1.msra.mxu0 %v511
    %590 = vmatprep.subr.mxu0 %v514
    %591 = vmatpush1.msra.mxu0 %v513
    %592 = vmatprep.subr.mxu0 %v516
    %593 = vmatpush1.msra.mxu0 %v515
    %594 = vmatprep.subr.mxu0 %v518
    %595 = vmatpush1.msra.mxu0 %v517
    %596 = vmatprep.subr.mxu0 %v520
    %597 = vmatpush1.msra.mxu0 %v519
    %598 = vmatprep.subr.mxu0 %v522
    %599 = vmatpush1.msra.mxu0 %v521
    %600 = vmatprep.subr.mxu0 %v524
    %601 = vmatpush1.msra.mxu0 %v523
    %602 = vmatprep.subr.mxu0 %v526
    %603 = vmatpush1.msra.mxu0 %v525
    %604 = vmatprep.subr.mxu0 %v528
    %605 = vmatpush1.msra.mxu0 %v527
    %606 = vmatprep.subr.mxu0 %v530
    %607 = vmatpush1.msra.mxu0 %v529
    %608 = vmatprep.subr.mxu0 %v532
    %609 = vmatpush1.msra.mxu0 %v531
    %610 = vmatprep.subr.mxu0 %v534
    %611 = vmatpush1.msra.mxu0 %v533
    %612 = vmatprep.subr.mxu0 %v536
    %613 = vmatpush1.msra.mxu0 %v535
    %614 = vmatprep.subr.mxu0 %v538
    %615 = vmatpush1.msra.mxu0 %v537
    %616 = vmatprep.subr.mxu0 %v540
    %617 = vmatpush1.msra.mxu0 %v539
    %618 = vmatprep.subr.mxu0 %v542
    %619 = vmatpush1.msra.mxu0 %v541
    %620 = vmatprep.subr.mxu0 %v544
    %621 = vmatpush1.msra.mxu0 %v543
    %622 = vmatprep.subr.mxu0 %v546
    %623 = vmatpush1.msra.mxu0 %v545
    %624 = vmatprep.subr.mxu0 %v548
    %625 = vmatpush1.msra.mxu0 %v547
    %626 = vmatprep.subr.mxu0 %v550
    %627 = vmatpush1.msra.mxu0 %v549
    %628 = vmatprep.subr.mxu0 %v552
    %629 = vmatpush1.msra.mxu0 %v551
    %630 = vmatprep.subr.mxu0 %v554
    %631 = vmatpush1.msra.mxu0 %v553
    %632 = vmatprep.subr.mxu0 %v556
    %633 = vmatpush1.msra.mxu0 %v555
    %634 = vmatprep.subr.mxu0 %v558
    %635 = vmatpush1.msra.mxu0 %v557
    %636 = vmatprep.subr.mxu0 %v560
    %637 = vmatpush1.msra.mxu0 %v559
    %638 = vmatprep.subr.mxu0 %v562
    %639 = vmatpush1.msra.mxu0 %v561
    %640 = vmatprep.subr.mxu0 %v564
    %641 = vmatpush1.msra.mxu0 %v563
    %642 = vmatprep.subr.mxu0 %v566
    %643 = vmatpush1.msra.mxu0 %v565
    %644 = vmatprep.subr.mxu0 %v568
    %645 = vmatpush1.msra.mxu0 %v567
    %646 = vmatprep.mubr.f32.mxu0 %v502
    %647 = vmatmul.mubr.f32.gmra.mrb[0].mxu0 %v501
    %v648 = vpop.f32.mrb[0].mxu0
    %v649 = vadd.f32 %v575, %v648
    %v650 = vpop.f32.mrb[0].mxu0
    %v651 = vadd.f32 %v579, %v650
    %652 = vmatprep.mubr.f32.mxu0 %v504
    %653 = vmatmul.mubr.f32.gmra.mrb[0].mxu0 %v503
    %v654 = vpop.f32.mrb[0].mxu0
    %v655 = vadd.f32 %v575, %v654
    %v656 = vpop.f32.mrb[0].mxu0
    %v657 = vadd.f32 %v579, %v656
    %658 = vdwg.mxu0
    %v659 = vtanh.pop %v649
    %v660 = vtanh.pop %v651
    %v661 = vtanh.pop %v655
    %v662 = vtanh.pop %v657
    %663 = vst [vmem:[%s3] sm:$0xff] %v659
    %664 = vst [vmem:[%s3 + $0x8] sm:$0xff] %v660
    %665 = vst [vmem:[%s3 + $0x10] sm:$0xff] %v661
    %666 = vst [vmem:[%s3 + $0x18] sm:$0xff] %v662
    // Predicated region
    $region22: #{forward.1} parent=1 // pred_check
      _
    $region23: #{forward.1} parent=1 // pred_check_branch
      %668 = sbr.rel (0) target = $region25
    $region24: #{forward.1} parent=1 // pred_region
      _
    $region25: #{forward.1} parent=1 // pred_fallthru
      _
    // Predicated region
    $region26: #{forward.1} parent=1 // pred_check
      _
    $region27: #{forward.1} parent=1 // pred_check_branch
      %670 = sbr.rel (0) target = $region29
    $region28: #{forward.1} parent=1 // pred_region
      _
    $region29: #{forward.1} parent=1 // pred_fallthru
      _
    %671 = vsyncpa [#allocation3], 1
    %672 = vsyncpa [#allocation5], 1

</llo_original>
